<compile_context>
chip_gen: v7x
topology: tpu7x:2x2x1
jax: 0.10.0
libtpu: 0.0.40
codegen_flags: <defaults>
</compile_context>

<pallas_src>
import math
import functools

import jax
import jax.numpy as jnp
from jax.experimental import pallas as pl
from jax.experimental.pallas import tpu as pltpu


def _embed_gather_kernel(ids_ref, emb_hbm, out_ref, gbuf, sems, *,
                         tokens_per_tile, tiles_per_core, scale, vocab_size):
    """Double-buffered embedding-row gather + sqrt(d_model) scale.

    ids_ref : (N_pad,) int32 scalar-prefetch ref in SMEM (all token ids).
    emb_hbm : (vocab_size, d_model) embedding table left in HBM (pl.ANY).
    out_ref : (T, d_model) output tile in VMEM.
    gbuf    : (2, T, d_model) VMEM double buffer receiving gathered rows.
    sems    : (2,) DMA semaphores, one per gather-buffer slot.
    """
    T = tokens_per_tile
    p = pl.program_id(0)          # "parallel" core axis
    i = pl.program_id(1)          # sequential tile axis (carries the prefetch)
    cur = i % 2
    nxt = 1 - cur

    def issue(tile_idx, slot):
        base = tile_idx * T
        # Static Python loop: T DMA starts, no waits in between.
        for t in range(T):
            row = jnp.clip(ids_ref[base + t], 0, vocab_size - 1)
            pltpu.make_async_copy(emb_hbm.at[row], gbuf.at[slot, t],
                                  sems.at[slot]).start()

    # First tile of this core's range was not prefetched by a previous step.
    @pl.when(i == 0)
    def _():
        issue(p * tiles_per_core, cur)

    # Prefetch the NEXT tile's rows into the other slot before waiting,
    # hiding its gather latency behind this tile's compute + writeback.
    @pl.when(i + 1 < tiles_per_core)
    def _():
        issue(p * tiles_per_core + i + 1, nxt)

    # Single aggregate wait: same semaphore, total bytes == T row copies.
    pltpu.make_async_copy(emb_hbm.at[pl.ds(0, T)], gbuf.at[cur],
                          sems.at[cur]).wait()

    # One dense (T, d_model) store: sublane-full, lane-dense, unmasked vst.
    out_ref[...] = (gbuf[cur].astype(jnp.float32) * scale).astype(out_ref.dtype)


def input_embeddings(x_ids: jax.Array, emb_table: jax.Array, *,
                     tokens_per_tile: int = 128,
                     num_parallel: int = 2) -> jax.Array:
    """Pallas equivalent of InputEmbeddings.forward.

    x_ids:     (...) int32 token ids in [0, vocab_size)
    emb_table: (vocab_size, d_model), float32 or bfloat16
    returns:   (..., d_model) in emb_table.dtype
    """
    vocab_size, d_model = emb_table.shape
    T = int(tokens_per_tile)
    assert T % 8 == 0, "tokens_per_tile must be a multiple of 8 (sublane tile)"
    assert d_model % 128 == 0, "d_model must be a multiple of 128 (lane tile)"
    assert T <= vocab_size, "aggregate-wait descriptor slices T table rows"

    orig_shape = x_ids.shape
    flat_ids = x_ids.reshape(-1).astype(jnp.int32)
    N = flat_ids.shape[0]

    n_tiles = pl.cdiv(N, T)
    P = num_parallel if n_tiles >= num_parallel else 1
    tiles_per_core = pl.cdiv(n_tiles, P)
    N_pad = P * tiles_per_core * T
    if N_pad != N:
        # Pad with id 0: those rows are gathered/stored then sliced off below.
        flat_ids = jnp.pad(flat_ids, (0, N_pad - N))

    scale = float(math.sqrt(d_model))

    kernel = functools.partial(
        _embed_gather_kernel, tokens_per_tile=T, tiles_per_core=tiles_per_core,
        scale=scale, vocab_size=vocab_size)

    out_flat = pl.pallas_call(
        kernel,
        out_shape=jax.ShapeDtypeStruct((N_pad, d_model), emb_table.dtype),
        grid_spec=pltpu.PrefetchScalarGridSpec(
            num_scalar_prefetch=1,                       # flat token ids -> SMEM
            grid=(P, tiles_per_core),
            in_specs=[
                pl.BlockSpec(memory_space=pl.ANY),       # table stays in HBM
            ],
            out_specs=pl.BlockSpec(
                (T, d_model),
                lambda p, i, ids: (p * tiles_per_core + i, 0)),
            scratch_shapes=[
                pltpu.VMEM((2, T, d_model), emb_table.dtype),  # gather dbl-buf
                pltpu.SemaphoreType.DMA((2,)),                 # one sem / slot
            ],
        ),
        compiler_params=pltpu.CompilerParams(
            # Outer axis shards across TensorCores on multi-core chips; the
            # inner axis is sequential so the cross-step prefetch carry is safe.
            dimension_semantics=("parallel", "arbitrary"),
        ),
    )(flat_ids, emb_table)

    if N_pad != N:
        out_flat = out_flat[:N]
    return out_flat.reshape(*orig_shape, d_model)


if __name__ == "__main__":
    d_model = 128          # lane-dense last dim (multiple of 128)
    vocab_size = 64
    batch, seq = 2, 16     # N = 32 tokens -> 4 tiles of 8 -> 2 tiles per core axis

    key = jax.random.PRNGKey(0)
    k_emb, k_ids = jax.random.split(key)

    # nn.Embedding default init: weight ~ N(0, 1)
    emb_table = jax.random.normal(k_emb, (vocab_size, d_model), dtype=jnp.float32)
    x_ids = jax.random.randint(k_ids, (batch, seq), 0, vocab_size, dtype=jnp.int32)

    # Small tile for the demo so the grid has multiple steps and the cross-step
    # prefetch path is exercised; production configs should use T=128 or 256.
    out = input_embeddings(x_ids, emb_table, tokens_per_tile=8)
    out = jax.block_until_ready(out)

    # Reference check in plain JAX (gather + scale).
    ref = emb_table[x_ids] * math.sqrt(d_model)
    assert out.shape == (batch, seq, d_model)
    assert jnp.allclose(out, ref, atol=1e-6, rtol=1e-6)

    print("KERNEL_OK")
</pallas_src>

<mosaic_0001>
module attributes {stable_mosaic.version = 11 : i64} {
  func.func @_embed_gather_kernel(%arg0: i32, %arg1: i32, %arg2: memref<32xi32, #tpu.memory_space<smem>>, %arg3: memref<64x128xf32, #tpu.memory_space<any>>, %arg4: memref<8x128xf32, #tpu.memory_space<vmem>>, %arg5: memref<2x8x128xf32, #tpu.memory_space<vmem>>, %arg6: memref<2x!tpu.dma_semaphore, #tpu.memory_space<semaphore_mem>>) attributes {dimension_semantics = [#tpu.dimension_semantics<parallel>, #tpu.dimension_semantics<arbitrary>], iteration_bounds = array<i64: 2, 2>, scalar_prefetch = 1 : i64, scratch_operands = 2 : i64, tpu.core_type = #tpu.core_type<tc>, window_params = [{}, {transform_indices = @transform_1, window_bounds = array<i64: 8, 128>}]} {
    %c2_i32 = arith.constant 2 : i32
    %c0_i32 = arith.constant 0 : i32
    %0 = arith.cmpi eq, %c2_i32, %c0_i32 : i32
    %c1_i32 = arith.constant 1 : i32
    %1 = arith.select %0, %c1_i32, %c2_i32 : i32
    %2 = arith.remsi %arg1, %1 : i32
    %c0_i32_0 = arith.constant 0 : i32
    %3 = arith.cmpi ne, %2, %c0_i32_0 : i32
    %c0_i32_1 = arith.constant 0 : i32
    %4 = arith.cmpi slt, %2, %c0_i32_1 : i32
    %c0_i32_2 = arith.constant 0 : i32
    %5 = arith.cmpi slt, %1, %c0_i32_2 : i32
    %6 = arith.xori %4, %5 : i1
    %7 = arith.andi %6, %3 : i1
    %8 = arith.addi %2, %1 : i32
    %9 = arith.select %7, %8, %2 : i32
    %c1_i32_3 = arith.constant 1 : i32
    %10 = arith.subi %c1_i32_3, %9 : i32
    %c0_i32_4 = arith.constant 0 : i32
    %11 = arith.cmpi eq, %arg1, %c0_i32_4 : i32
    %12 = arith.extui %11 : i1 to i32
    %c0_i32_5 = arith.constant 0 : i32
    %13 = arith.cmpi ne, %12, %c0_i32_5 : i32
    scf.if %13 {
      %c2_i32_16 = arith.constant 2 : i32
      %29 = arith.muli %arg0, %c2_i32_16 : i32
      %c8_i32 = arith.constant 8 : i32
      %30 = arith.muli %29, %c8_i32 : i32
      %c0_i32_17 = arith.constant 0 : i32
      %31 = arith.addi %30, %c0_i32_17 : i32
      %32 = arith.index_cast %31 : i32 to index
      %33 = memref.load %arg2[%32] : memref<32xi32, #tpu.memory_space<smem>>
      %c0_i32_18 = arith.constant 0 : i32
      %c63_i32 = arith.constant 63 : i32
      %34 = arith.maxsi %c0_i32_18, %33 : i32
      %35 = arith.minsi %c63_i32, %34 : i32
      %c0_i32_19 = arith.constant 0 : i32
      %c0_i32_20 = arith.constant 0 : i32
      %36 = tpu.memref_slice %arg3[%35, %c0_i32_20] : memref<64x128xf32, #tpu.memory_space<any>> -> memref<1x128xf32, #tpu.memory_space<any>>
      %37 = tpu.memref_squeeze %36 : memref<1x128xf32, #tpu.memory_space<any>> -> memref<128xf32, #tpu.memory_space<any>>
      %c0_i32_21 = arith.constant 0 : i32
      %38 = tpu.memref_slice %arg5[%9, %c0_i32_19, %c0_i32_21] : memref<2x8x128xf32, #tpu.memory_space<vmem>> -> memref<1x1x128xf32, #tpu.memory_space<vmem>>
      %39 = tpu.memref_squeeze %38 : memref<1x1x128xf32, #tpu.memory_space<vmem>> -> memref<128xf32, #tpu.memory_space<vmem>>
      %40 = tpu.memref_slice %arg6[%9] : memref<2x!tpu.dma_semaphore, #tpu.memory_space<semaphore_mem>> -> memref<1x!tpu.dma_semaphore, #tpu.memory_space<semaphore_mem>>
      %41 = tpu.memref_squeeze %40 : memref<1x!tpu.dma_semaphore, #tpu.memory_space<semaphore_mem>> -> memref<!tpu.dma_semaphore, #tpu.memory_space<semaphore_mem>>
      tpu.enqueue_dma source(%37 : memref<128xf32, #tpu.memory_space<any>>) target(%39 : memref<128xf32, #tpu.memory_space<vmem>>) target_semaphore(%41 : memref<!tpu.dma_semaphore, #tpu.memory_space<semaphore_mem>>)
      %c1_i32_22 = arith.constant 1 : i32
      %42 = arith.addi %30, %c1_i32_22 : i32
      %43 = arith.index_cast %42 : i32 to index
      %44 = memref.load %arg2[%43] : memref<32xi32, #tpu.memory_space<smem>>
      %c0_i32_23 = arith.constant 0 : i32
      %c63_i32_24 = arith.constant 63 : i32
      %45 = arith.maxsi %c0_i32_23, %44 : i32
      %46 = arith.minsi %c63_i32_24, %45 : i32
      %c1_i32_25 = arith.constant 1 : i32
      %c0_i32_26 = arith.constant 0 : i32
      %47 = tpu.memref_slice %arg3[%46, %c0_i32_26] : memref<64x128xf32, #tpu.memory_space<any>> -> memref<1x128xf32, #tpu.memory_space<any>>
      %48 = tpu.memref_squeeze %47 : memref<1x128xf32, #tpu.memory_space<any>> -> memref<128xf32, #tpu.memory_space<any>>
      %c0_i32_27 = arith.constant 0 : i32
      %49 = tpu.memref_slice %arg5[%9, %c1_i32_25, %c0_i32_27] : memref<2x8x128xf32, #tpu.memory_space<vmem>> -> memref<1x1x128xf32, #tpu.memory_space<vmem>>
      %50 = tpu.memref_squeeze %49 : memref<1x1x128xf32, #tpu.memory_space<vmem>> -> memref<128xf32, #tpu.memory_space<vmem>>
      %51 = tpu.memref_slice %arg6[%9] : memref<2x!tpu.dma_semaphore, #tpu.memory_space<semaphore_mem>> -> memref<1x!tpu.dma_semaphore, #tpu.memory_space<semaphore_mem>>
      %52 = tpu.memref_squeeze %51 : memref<1x!tpu.dma_semaphore, #tpu.memory_space<semaphore_mem>> -> memref<!tpu.dma_semaphore, #tpu.memory_space<semaphore_mem>>
      tpu.enqueue_dma source(%48 : memref<128xf32, #tpu.memory_space<any>>) target(%50 : memref<128xf32, #tpu.memory_space<vmem>>) target_semaphore(%52 : memref<!tpu.dma_semaphore, #tpu.memory_space<semaphore_mem>>)
      %c2_i32_28 = arith.constant 2 : i32
      %53 = arith.addi %30, %c2_i32_28 : i32
      %54 = arith.index_cast %53 : i32 to index
      %55 = memref.load %arg2[%54] : memref<32xi32, #tpu.memory_space<smem>>
      %c0_i32_29 = arith.constant 0 : i32
      %c63_i32_30 = arith.constant 63 : i32
      %56 = arith.maxsi %c0_i32_29, %55 : i32
      %57 = arith.minsi %c63_i32_30, %56 : i32
      %c2_i32_31 = arith.constant 2 : i32
      %c0_i32_32 = arith.constant 0 : i32
      %58 = tpu.memref_slice %arg3[%57, %c0_i32_32] : memref<64x128xf32, #tpu.memory_space<any>> -> memref<1x128xf32, #tpu.memory_space<any>>
      %59 = tpu.memref_squeeze %58 : memref<1x128xf32, #tpu.memory_space<any>> -> memref<128xf32, #tpu.memory_space<any>>
      %c0_i32_33 = arith.constant 0 : i32
      %60 = tpu.memref_slice %arg5[%9, %c2_i32_31, %c0_i32_33] : memref<2x8x128xf32, #tpu.memory_space<vmem>> -> memref<1x1x128xf32, #tpu.memory_space<vmem>>
      %61 = tpu.memref_squeeze %60 : memref<1x1x128xf32, #tpu.memory_space<vmem>> -> memref<128xf32, #tpu.memory_space<vmem>>
      %62 = tpu.memref_slice %arg6[%9] : memref<2x!tpu.dma_semaphore, #tpu.memory_space<semaphore_mem>> -> memref<1x!tpu.dma_semaphore, #tpu.memory_space<semaphore_mem>>
      %63 = tpu.memref_squeeze %62 : memref<1x!tpu.dma_semaphore, #tpu.memory_space<semaphore_mem>> -> memref<!tpu.dma_semaphore, #tpu.memory_space<semaphore_mem>>
      tpu.enqueue_dma source(%59 : memref<128xf32, #tpu.memory_space<any>>) target(%61 : memref<128xf32, #tpu.memory_space<vmem>>) target_semaphore(%63 : memref<!tpu.dma_semaphore, #tpu.memory_space<semaphore_mem>>)
      %c3_i32 = arith.constant 3 : i32
      %64 = arith.addi %30, %c3_i32 : i32
      %65 = arith.index_cast %64 : i32 to index
      %66 = memref.load %arg2[%65] : memref<32xi32, #tpu.memory_space<smem>>
      %c0_i32_34 = arith.constant 0 : i32
      %c63_i32_35 = arith.constant 63 : i32
      %67 = arith.maxsi %c0_i32_34, %66 : i32
      %68 = arith.minsi %c63_i32_35, %67 : i32
      %c3_i32_36 = arith.constant 3 : i32
      %c0_i32_37 = arith.constant 0 : i32
      %69 = tpu.memref_slice %arg3[%68, %c0_i32_37] : memref<64x128xf32, #tpu.memory_space<any>> -> memref<1x128xf32, #tpu.memory_space<any>>
      %70 = tpu.memref_squeeze %69 : memref<1x128xf32, #tpu.memory_space<any>> -> memref<128xf32, #tpu.memory_space<any>>
      %c0_i32_38 = arith.constant 0 : i32
      %71 = tpu.memref_slice %arg5[%9, %c3_i32_36, %c0_i32_38] : memref<2x8x128xf32, #tpu.memory_space<vmem>> -> memref<1x1x128xf32, #tpu.memory_space<vmem>>
      %72 = tpu.memref_squeeze %71 : memref<1x1x128xf32, #tpu.memory_space<vmem>> -> memref<128xf32, #tpu.memory_space<vmem>>
      %73 = tpu.memref_slice %arg6[%9] : memref<2x!tpu.dma_semaphore, #tpu.memory_space<semaphore_mem>> -> memref<1x!tpu.dma_semaphore, #tpu.memory_space<semaphore_mem>>
      %74 = tpu.memref_squeeze %73 : memref<1x!tpu.dma_semaphore, #tpu.memory_space<semaphore_mem>> -> memref<!tpu.dma_semaphore, #tpu.memory_space<semaphore_mem>>
      tpu.enqueue_dma source(%70 : memref<128xf32, #tpu.memory_space<any>>) target(%72 : memref<128xf32, #tpu.memory_space<vmem>>) target_semaphore(%74 : memref<!tpu.dma_semaphore, #tpu.memory_space<semaphore_mem>>)
      %c4_i32 = arith.constant 4 : i32
      %75 = arith.addi %30, %c4_i32 : i32
      %76 = arith.index_cast %75 : i32 to index
      %77 = memref.load %arg2[%76] : memref<32xi32, #tpu.memory_space<smem>>
      %c0_i32_39 = arith.constant 0 : i32
      %c63_i32_40 = arith.constant 63 : i32
      %78 = arith.maxsi %c0_i32_39, %77 : i32
      %79 = arith.minsi %c63_i32_40, %78 : i32
      %c4_i32_41 = arith.constant 4 : i32
      %c0_i32_42 = arith.constant 0 : i32
      %80 = tpu.memref_slice %arg3[%79, %c0_i32_42] : memref<64x128xf32, #tpu.memory_space<any>> -> memref<1x128xf32, #tpu.memory_space<any>>
      %81 = tpu.memref_squeeze %80 : memref<1x128xf32, #tpu.memory_space<any>> -> memref<128xf32, #tpu.memory_space<any>>
      %c0_i32_43 = arith.constant 0 : i32
      %82 = tpu.memref_slice %arg5[%9, %c4_i32_41, %c0_i32_43] : memref<2x8x128xf32, #tpu.memory_space<vmem>> -> memref<1x1x128xf32, #tpu.memory_space<vmem>>
      %83 = tpu.memref_squeeze %82 : memref<1x1x128xf32, #tpu.memory_space<vmem>> -> memref<128xf32, #tpu.memory_space<vmem>>
      %84 = tpu.memref_slice %arg6[%9] : memref<2x!tpu.dma_semaphore, #tpu.memory_space<semaphore_mem>> -> memref<1x!tpu.dma_semaphore, #tpu.memory_space<semaphore_mem>>
      %85 = tpu.memref_squeeze %84 : memref<1x!tpu.dma_semaphore, #tpu.memory_space<semaphore_mem>> -> memref<!tpu.dma_semaphore, #tpu.memory_space<semaphore_mem>>
      tpu.enqueue_dma source(%81 : memref<128xf32, #tpu.memory_space<any>>) target(%83 : memref<128xf32, #tpu.memory_space<vmem>>) target_semaphore(%85 : memref<!tpu.dma_semaphore, #tpu.memory_space<semaphore_mem>>)
      %c5_i32 = arith.constant 5 : i32
      %86 = arith.addi %30, %c5_i32 : i32
      %87 = arith.index_cast %86 : i32 to index
      %88 = memref.load %arg2[%87] : memref<32xi32, #tpu.memory_space<smem>>
      %c0_i32_44 = arith.constant 0 : i32
      %c63_i32_45 = arith.constant 63 : i32
      %89 = arith.maxsi %c0_i32_44, %88 : i32
      %90 = arith.minsi %c63_i32_45, %89 : i32
      %c5_i32_46 = arith.constant 5 : i32
      %c0_i32_47 = arith.constant 0 : i32
      %91 = tpu.memref_slice %arg3[%90, %c0_i32_47] : memref<64x128xf32, #tpu.memory_space<any>> -> memref<1x128xf32, #tpu.memory_space<any>>
      %92 = tpu.memref_squeeze %91 : memref<1x128xf32, #tpu.memory_space<any>> -> memref<128xf32, #tpu.memory_space<any>>
      %c0_i32_48 = arith.constant 0 : i32
      %93 = tpu.memref_slice %arg5[%9, %c5_i32_46, %c0_i32_48] : memref<2x8x128xf32, #tpu.memory_space<vmem>> -> memref<1x1x128xf32, #tpu.memory_space<vmem>>
      %94 = tpu.memref_squeeze %93 : memref<1x1x128xf32, #tpu.memory_space<vmem>> -> memref<128xf32, #tpu.memory_space<vmem>>
      %95 = tpu.memref_slice %arg6[%9] : memref<2x!tpu.dma_semaphore, #tpu.memory_space<semaphore_mem>> -> memref<1x!tpu.dma_semaphore, #tpu.memory_space<semaphore_mem>>
      %96 = tpu.memref_squeeze %95 : memref<1x!tpu.dma_semaphore, #tpu.memory_space<semaphore_mem>> -> memref<!tpu.dma_semaphore, #tpu.memory_space<semaphore_mem>>
      tpu.enqueue_dma source(%92 : memref<128xf32, #tpu.memory_space<any>>) target(%94 : memref<128xf32, #tpu.memory_space<vmem>>) target_semaphore(%96 : memref<!tpu.dma_semaphore, #tpu.memory_space<semaphore_mem>>)
      %c6_i32 = arith.constant 6 : i32
      %97 = arith.addi %30, %c6_i32 : i32
      %98 = arith.index_cast %97 : i32 to index
      %99 = memref.load %arg2[%98] : memref<32xi32, #tpu.memory_space<smem>>
      %c0_i32_49 = arith.constant 0 : i32
      %c63_i32_50 = arith.constant 63 : i32
      %100 = arith.maxsi %c0_i32_49, %99 : i32
      %101 = arith.minsi %c63_i32_50, %100 : i32
      %c6_i32_51 = arith.constant 6 : i32
      %c0_i32_52 = arith.constant 0 : i32
      %102 = tpu.memref_slice %arg3[%101, %c0_i32_52] : memref<64x128xf32, #tpu.memory_space<any>> -> memref<1x128xf32, #tpu.memory_space<any>>
      %103 = tpu.memref_squeeze %102 : memref<1x128xf32, #tpu.memory_space<any>> -> memref<128xf32, #tpu.memory_space<any>>
      %c0_i32_53 = arith.constant 0 : i32
      %104 = tpu.memref_slice %arg5[%9, %c6_i32_51, %c0_i32_53] : memref<2x8x128xf32, #tpu.memory_space<vmem>> -> memref<1x1x128xf32, #tpu.memory_space<vmem>>
      %105 = tpu.memref_squeeze %104 : memref<1x1x128xf32, #tpu.memory_space<vmem>> -> memref<128xf32, #tpu.memory_space<vmem>>
      %106 = tpu.memref_slice %arg6[%9] : memref<2x!tpu.dma_semaphore, #tpu.memory_space<semaphore_mem>> -> memref<1x!tpu.dma_semaphore, #tpu.memory_space<semaphore_mem>>
      %107 = tpu.memref_squeeze %106 : memref<1x!tpu.dma_semaphore, #tpu.memory_space<semaphore_mem>> -> memref<!tpu.dma_semaphore, #tpu.memory_space<semaphore_mem>>
      tpu.enqueue_dma source(%103 : memref<128xf32, #tpu.memory_space<any>>) target(%105 : memref<128xf32, #tpu.memory_space<vmem>>) target_semaphore(%107 : memref<!tpu.dma_semaphore, #tpu.memory_space<semaphore_mem>>)
      %c7_i32 = arith.constant 7 : i32
      %108 = arith.addi %30, %c7_i32 : i32
      %109 = arith.index_cast %108 : i32 to index
      %110 = memref.load %arg2[%109] : memref<32xi32, #tpu.memory_space<smem>>
      %c0_i32_54 = arith.constant 0 : i32
      %c63_i32_55 = arith.constant 63 : i32
      %111 = arith.maxsi %c0_i32_54, %110 : i32
      %112 = arith.minsi %c63_i32_55, %111 : i32
      %c7_i32_56 = arith.constant 7 : i32
      %c0_i32_57 = arith.constant 0 : i32
      %113 = tpu.memref_slice %arg3[%112, %c0_i32_57] : memref<64x128xf32, #tpu.memory_space<any>> -> memref<1x128xf32, #tpu.memory_space<any>>
      %114 = tpu.memref_squeeze %113 : memref<1x128xf32, #tpu.memory_space<any>> -> memref<128xf32, #tpu.memory_space<any>>
      %c0_i32_58 = arith.constant 0 : i32
      %115 = tpu.memref_slice %arg5[%9, %c7_i32_56, %c0_i32_58] : memref<2x8x128xf32, #tpu.memory_space<vmem>> -> memref<1x1x128xf32, #tpu.memory_space<vmem>>
      %116 = tpu.memref_squeeze %115 : memref<1x1x128xf32, #tpu.memory_space<vmem>> -> memref<128xf32, #tpu.memory_space<vmem>>
      %117 = tpu.memref_slice %arg6[%9] : memref<2x!tpu.dma_semaphore, #tpu.memory_space<semaphore_mem>> -> memref<1x!tpu.dma_semaphore, #tpu.memory_space<semaphore_mem>>
      %118 = tpu.memref_squeeze %117 : memref<1x!tpu.dma_semaphore, #tpu.memory_space<semaphore_mem>> -> memref<!tpu.dma_semaphore, #tpu.memory_space<semaphore_mem>>
      tpu.enqueue_dma source(%114 : memref<128xf32, #tpu.memory_space<any>>) target(%116 : memref<128xf32, #tpu.memory_space<vmem>>) target_semaphore(%118 : memref<!tpu.dma_semaphore, #tpu.memory_space<semaphore_mem>>)
    } else {
    }
    %c1_i32_6 = arith.constant 1 : i32
    %14 = arith.addi %arg1, %c1_i32_6 : i32
    %c2_i32_7 = arith.constant 2 : i32
    %15 = arith.cmpi slt, %14, %c2_i32_7 : i32
    %16 = arith.extui %15 : i1 to i32
    %c0_i32_8 = arith.constant 0 : i32
    %17 = arith.cmpi ne, %16, %c0_i32_8 : i32
    scf.if %17 {
      %c2_i32_16 = arith.constant 2 : i32
      %29 = arith.muli %arg0, %c2_i32_16 : i32
      %30 = arith.addi %29, %arg1 : i32
      %c1_i32_17 = arith.constant 1 : i32
      %31 = arith.addi %30, %c1_i32_17 : i32
      %c8_i32 = arith.constant 8 : i32
      %32 = arith.muli %31, %c8_i32 : i32
      %c0_i32_18 = arith.constant 0 : i32
      %33 = arith.addi %32, %c0_i32_18 : i32
      %34 = arith.index_cast %33 : i32 to index
      %35 = memref.load %arg2[%34] : memref<32xi32, #tpu.memory_space<smem>>
      %c0_i32_19 = arith.constant 0 : i32
      %c63_i32 = arith.constant 63 : i32
      %36 = arith.maxsi %c0_i32_19, %35 : i32
      %37 = arith.minsi %c63_i32, %36 : i32
      %c0_i32_20 = arith.constant 0 : i32
      %c0_i32_21 = arith.constant 0 : i32
      %38 = tpu.memref_slice %arg3[%37, %c0_i32_21] : memref<64x128xf32, #tpu.memory_space<any>> -> memref<1x128xf32, #tpu.memory_space<any>>
      %39 = tpu.memref_squeeze %38 : memref<1x128xf32, #tpu.memory_space<any>> -> memref<128xf32, #tpu.memory_space<any>>
      %c0_i32_22 = arith.constant 0 : i32
      %40 = tpu.memref_slice %arg5[%10, %c0_i32_20, %c0_i32_22] : memref<2x8x128xf32, #tpu.memory_space<vmem>> -> memref<1x1x128xf32, #tpu.memory_space<vmem>>
      %41 = tpu.memref_squeeze %40 : memref<1x1x128xf32, #tpu.memory_space<vmem>> -> memref<128xf32, #tpu.memory_space<vmem>>
      %42 = tpu.memref_slice %arg6[%10] : memref<2x!tpu.dma_semaphore, #tpu.memory_space<semaphore_mem>> -> memref<1x!tpu.dma_semaphore, #tpu.memory_space<semaphore_mem>>
      %43 = tpu.memref_squeeze %42 : memref<1x!tpu.dma_semaphore, #tpu.memory_space<semaphore_mem>> -> memref<!tpu.dma_semaphore, #tpu.memory_space<semaphore_mem>>
      tpu.enqueue_dma source(%39 : memref<128xf32, #tpu.memory_space<any>>) target(%41 : memref<128xf32, #tpu.memory_space<vmem>>) target_semaphore(%43 : memref<!tpu.dma_semaphore, #tpu.memory_space<semaphore_mem>>)
      %c1_i32_23 = arith.constant 1 : i32
      %44 = arith.addi %32, %c1_i32_23 : i32
      %45 = arith.index_cast %44 : i32 to index
      %46 = memref.load %arg2[%45] : memref<32xi32, #tpu.memory_space<smem>>
      %c0_i32_24 = arith.constant 0 : i32
      %c63_i32_25 = arith.constant 63 : i32
      %47 = arith.maxsi %c0_i32_24, %46 : i32
      %48 = arith.minsi %c63_i32_25, %47 : i32
      %c1_i32_26 = arith.constant 1 : i32
      %c0_i32_27 = arith.constant 0 : i32
      %49 = tpu.memref_slice %arg3[%48, %c0_i32_27] : memref<64x128xf32, #tpu.memory_space<any>> -> memref<1x128xf32, #tpu.memory_space<any>>
      %50 = tpu.memref_squeeze %49 : memref<1x128xf32, #tpu.memory_space<any>> -> memref<128xf32, #tpu.memory_space<any>>
      %c0_i32_28 = arith.constant 0 : i32
      %51 = tpu.memref_slice %arg5[%10, %c1_i32_26, %c0_i32_28] : memref<2x8x128xf32, #tpu.memory_space<vmem>> -> memref<1x1x128xf32, #tpu.memory_space<vmem>>
      %52 = tpu.memref_squeeze %51 : memref<1x1x128xf32, #tpu.memory_space<vmem>> -> memref<128xf32, #tpu.memory_space<vmem>>
      %53 = tpu.memref_slice %arg6[%10] : memref<2x!tpu.dma_semaphore, #tpu.memory_space<semaphore_mem>> -> memref<1x!tpu.dma_semaphore, #tpu.memory_space<semaphore_mem>>
      %54 = tpu.memref_squeeze %53 : memref<1x!tpu.dma_semaphore, #tpu.memory_space<semaphore_mem>> -> memref<!tpu.dma_semaphore, #tpu.memory_space<semaphore_mem>>
      tpu.enqueue_dma source(%50 : memref<128xf32, #tpu.memory_space<any>>) target(%52 : memref<128xf32, #tpu.memory_space<vmem>>) target_semaphore(%54 : memref<!tpu.dma_semaphore, #tpu.memory_space<semaphore_mem>>)
      %c2_i32_29 = arith.constant 2 : i32
      %55 = arith.addi %32, %c2_i32_29 : i32
      %56 = arith.index_cast %55 : i32 to index
      %57 = memref.load %arg2[%56] : memref<32xi32, #tpu.memory_space<smem>>
      %c0_i32_30 = arith.constant 0 : i32
      %c63_i32_31 = arith.constant 63 : i32
      %58 = arith.maxsi %c0_i32_30, %57 : i32
      %59 = arith.minsi %c63_i32_31, %58 : i32
      %c2_i32_32 = arith.constant 2 : i32
      %c0_i32_33 = arith.constant 0 : i32
      %60 = tpu.memref_slice %arg3[%59, %c0_i32_33] : memref<64x128xf32, #tpu.memory_space<any>> -> memref<1x128xf32, #tpu.memory_space<any>>
      %61 = tpu.memref_squeeze %60 : memref<1x128xf32, #tpu.memory_space<any>> -> memref<128xf32, #tpu.memory_space<any>>
      %c0_i32_34 = arith.constant 0 : i32
      %62 = tpu.memref_slice %arg5[%10, %c2_i32_32, %c0_i32_34] : memref<2x8x128xf32, #tpu.memory_space<vmem>> -> memref<1x1x128xf32, #tpu.memory_space<vmem>>
      %63 = tpu.memref_squeeze %62 : memref<1x1x128xf32, #tpu.memory_space<vmem>> -> memref<128xf32, #tpu.memory_space<vmem>>
      %64 = tpu.memref_slice %arg6[%10] : memref<2x!tpu.dma_semaphore, #tpu.memory_space<semaphore_mem>> -> memref<1x!tpu.dma_semaphore, #tpu.memory_space<semaphore_mem>>
      %65 = tpu.memref_squeeze %64 : memref<1x!tpu.dma_semaphore, #tpu.memory_space<semaphore_mem>> -> memref<!tpu.dma_semaphore, #tpu.memory_space<semaphore_mem>>
      tpu.enqueue_dma source(%61 : memref<128xf32, #tpu.memory_space<any>>) target(%63 : memref<128xf32, #tpu.memory_space<vmem>>) target_semaphore(%65 : memref<!tpu.dma_semaphore, #tpu.memory_space<semaphore_mem>>)
      %c3_i32 = arith.constant 3 : i32
      %66 = arith.addi %32, %c3_i32 : i32
      %67 = arith.index_cast %66 : i32 to index
      %68 = memref.load %arg2[%67] : memref<32xi32, #tpu.memory_space<smem>>
      %c0_i32_35 = arith.constant 0 : i32
      %c63_i32_36 = arith.constant 63 : i32
      %69 = arith.maxsi %c0_i32_35, %68 : i32
      %70 = arith.minsi %c63_i32_36, %69 : i32
      %c3_i32_37 = arith.constant 3 : i32
      %c0_i32_38 = arith.constant 0 : i32
      %71 = tpu.memref_slice %arg3[%70, %c0_i32_38] : memref<64x128xf32, #tpu.memory_space<any>> -> memref<1x128xf32, #tpu.memory_space<any>>
      %72 = tpu.memref_squeeze %71 : memref<1x128xf32, #tpu.memory_space<any>> -> memref<128xf32, #tpu.memory_space<any>>
      %c0_i32_39 = arith.constant 0 : i32
      %73 = tpu.memref_slice %arg5[%10, %c3_i32_37, %c0_i32_39] : memref<2x8x128xf32, #tpu.memory_space<vmem>> -> memref<1x1x128xf32, #tpu.memory_space<vmem>>
      %74 = tpu.memref_squeeze %73 : memref<1x1x128xf32, #tpu.memory_space<vmem>> -> memref<128xf32, #tpu.memory_space<vmem>>
      %75 = tpu.memref_slice %arg6[%10] : memref<2x!tpu.dma_semaphore, #tpu.memory_space<semaphore_mem>> -> memref<1x!tpu.dma_semaphore, #tpu.memory_space<semaphore_mem>>
      %76 = tpu.memref_squeeze %75 : memref<1x!tpu.dma_semaphore, #tpu.memory_space<semaphore_mem>> -> memref<!tpu.dma_semaphore, #tpu.memory_space<semaphore_mem>>
      tpu.enqueue_dma source(%72 : memref<128xf32, #tpu.memory_space<any>>) target(%74 : memref<128xf32, #tpu.memory_space<vmem>>) target_semaphore(%76 : memref<!tpu.dma_semaphore, #tpu.memory_space<semaphore_mem>>)
      %c4_i32 = arith.constant 4 : i32
      %77 = arith.addi %32, %c4_i32 : i32
      %78 = arith.index_cast %77 : i32 to index
      %79 = memref.load %arg2[%78] : memref<32xi32, #tpu.memory_space<smem>>
      %c0_i32_40 = arith.constant 0 : i32
      %c63_i32_41 = arith.constant 63 : i32
      %80 = arith.maxsi %c0_i32_40, %79 : i32
      %81 = arith.minsi %c63_i32_41, %80 : i32
      %c4_i32_42 = arith.constant 4 : i32
      %c0_i32_43 = arith.constant 0 : i32
      %82 = tpu.memref_slice %arg3[%81, %c0_i32_43] : memref<64x128xf32, #tpu.memory_space<any>> -> memref<1x128xf32, #tpu.memory_space<any>>
      %83 = tpu.memref_squeeze %82 : memref<1x128xf32, #tpu.memory_space<any>> -> memref<128xf32, #tpu.memory_space<any>>
      %c0_i32_44 = arith.constant 0 : i32
      %84 = tpu.memref_slice %arg5[%10, %c4_i32_42, %c0_i32_44] : memref<2x8x128xf32, #tpu.memory_space<vmem>> -> memref<1x1x128xf32, #tpu.memory_space<vmem>>
      %85 = tpu.memref_squeeze %84 : memref<1x1x128xf32, #tpu.memory_space<vmem>> -> memref<128xf32, #tpu.memory_space<vmem>>
      %86 = tpu.memref_slice %arg6[%10] : memref<2x!tpu.dma_semaphore, #tpu.memory_space<semaphore_mem>> -> memref<1x!tpu.dma_semaphore, #tpu.memory_space<semaphore_mem>>
      %87 = tpu.memref_squeeze %86 : memref<1x!tpu.dma_semaphore, #tpu.memory_space<semaphore_mem>> -> memref<!tpu.dma_semaphore, #tpu.memory_space<semaphore_mem>>
      tpu.enqueue_dma source(%83 : memref<128xf32, #tpu.memory_space<any>>) target(%85 : memref<128xf32, #tpu.memory_space<vmem>>) target_semaphore(%87 : memref<!tpu.dma_semaphore, #tpu.memory_space<semaphore_mem>>)
      %c5_i32 = arith.constant 5 : i32
      %88 = arith.addi %32, %c5_i32 : i32
      %89 = arith.index_cast %88 : i32 to index
      %90 = memref.load %arg2[%89] : memref<32xi32, #tpu.memory_space<smem>>
      %c0_i32_45 = arith.constant 0 : i32
      %c63_i32_46 = arith.constant 63 : i32
      %91 = arith.maxsi %c0_i32_45, %90 : i32
      %92 = arith.minsi %c63_i32_46, %91 : i32
      %c5_i32_47 = arith.constant 5 : i32
      %c0_i32_48 = arith.constant 0 : i32
      %93 = tpu.memref_slice %arg3[%92, %c0_i32_48] : memref<64x128xf32, #tpu.memory_space<any>> -> memref<1x128xf32, #tpu.memory_space<any>>
      %94 = tpu.memref_squeeze %93 : memref<1x128xf32, #tpu.memory_space<any>> -> memref<128xf32, #tpu.memory_space<any>>
      %c0_i32_49 = arith.constant 0 : i32
      %95 = tpu.memref_slice %arg5[%10, %c5_i32_47, %c0_i32_49] : memref<2x8x128xf32, #tpu.memory_space<vmem>> -> memref<1x1x128xf32, #tpu.memory_space<vmem>>
      %96 = tpu.memref_squeeze %95 : memref<1x1x128xf32, #tpu.memory_space<vmem>> -> memref<128xf32, #tpu.memory_space<vmem>>
      %97 = tpu.memref_slice %arg6[%10] : memref<2x!tpu.dma_semaphore, #tpu.memory_space<semaphore_mem>> -> memref<1x!tpu.dma_semaphore, #tpu.memory_space<semaphore_mem>>
      %98 = tpu.memref_squeeze %97 : memref<1x!tpu.dma_semaphore, #tpu.memory_space<semaphore_mem>> -> memref<!tpu.dma_semaphore, #tpu.memory_space<semaphore_mem>>
      tpu.enqueue_dma source(%94 : memref<128xf32, #tpu.memory_space<any>>) target(%96 : memref<128xf32, #tpu.memory_space<vmem>>) target_semaphore(%98 : memref<!tpu.dma_semaphore, #tpu.memory_space<semaphore_mem>>)
      %c6_i32 = arith.constant 6 : i32
      %99 = arith.addi %32, %c6_i32 : i32
      %100 = arith.index_cast %99 : i32 to index
      %101 = memref.load %arg2[%100] : memref<32xi32, #tpu.memory_space<smem>>
      %c0_i32_50 = arith.constant 0 : i32
      %c63_i32_51 = arith.constant 63 : i32
      %102 = arith.maxsi %c0_i32_50, %101 : i32
      %103 = arith.minsi %c63_i32_51, %102 : i32
      %c6_i32_52 = arith.constant 6 : i32
      %c0_i32_53 = arith.constant 0 : i32
      %104 = tpu.memref_slice %arg3[%103, %c0_i32_53] : memref<64x128xf32, #tpu.memory_space<any>> -> memref<1x128xf32, #tpu.memory_space<any>>
      %105 = tpu.memref_squeeze %104 : memref<1x128xf32, #tpu.memory_space<any>> -> memref<128xf32, #tpu.memory_space<any>>
      %c0_i32_54 = arith.constant 0 : i32
      %106 = tpu.memref_slice %arg5[%10, %c6_i32_52, %c0_i32_54] : memref<2x8x128xf32, #tpu.memory_space<vmem>> -> memref<1x1x128xf32, #tpu.memory_space<vmem>>
      %107 = tpu.memref_squeeze %106 : memref<1x1x128xf32, #tpu.memory_space<vmem>> -> memref<128xf32, #tpu.memory_space<vmem>>
      %108 = tpu.memref_slice %arg6[%10] : memref<2x!tpu.dma_semaphore, #tpu.memory_space<semaphore_mem>> -> memref<1x!tpu.dma_semaphore, #tpu.memory_space<semaphore_mem>>
      %109 = tpu.memref_squeeze %108 : memref<1x!tpu.dma_semaphore, #tpu.memory_space<semaphore_mem>> -> memref<!tpu.dma_semaphore, #tpu.memory_space<semaphore_mem>>
      tpu.enqueue_dma source(%105 : memref<128xf32, #tpu.memory_space<any>>) target(%107 : memref<128xf32, #tpu.memory_space<vmem>>) target_semaphore(%109 : memref<!tpu.dma_semaphore, #tpu.memory_space<semaphore_mem>>)
      %c7_i32 = arith.constant 7 : i32
      %110 = arith.addi %32, %c7_i32 : i32
      %111 = arith.index_cast %110 : i32 to index
      %112 = memref.load %arg2[%111] : memref<32xi32, #tpu.memory_space<smem>>
      %c0_i32_55 = arith.constant 0 : i32
      %c63_i32_56 = arith.constant 63 : i32
      %113 = arith.maxsi %c0_i32_55, %112 : i32
      %114 = arith.minsi %c63_i32_56, %113 : i32
      %c7_i32_57 = arith.constant 7 : i32
      %c0_i32_58 = arith.constant 0 : i32
      %115 = tpu.memref_slice %arg3[%114, %c0_i32_58] : memref<64x128xf32, #tpu.memory_space<any>> -> memref<1x128xf32, #tpu.memory_space<any>>
      %116 = tpu.memref_squeeze %115 : memref<1x128xf32, #tpu.memory_space<any>> -> memref<128xf32, #tpu.memory_space<any>>
      %c0_i32_59 = arith.constant 0 : i32
      %117 = tpu.memref_slice %arg5[%10, %c7_i32_57, %c0_i32_59] : memref<2x8x128xf32, #tpu.memory_space<vmem>> -> memref<1x1x128xf32, #tpu.memory_space<vmem>>
      %118 = tpu.memref_squeeze %117 : memref<1x1x128xf32, #tpu.memory_space<vmem>> -> memref<128xf32, #tpu.memory_space<vmem>>
      %119 = tpu.memref_slice %arg6[%10] : memref<2x!tpu.dma_semaphore, #tpu.memory_space<semaphore_mem>> -> memref<1x!tpu.dma_semaphore, #tpu.memory_space<semaphore_mem>>
      %120 = tpu.memref_squeeze %119 : memref<1x!tpu.dma_semaphore, #tpu.memory_space<semaphore_mem>> -> memref<!tpu.dma_semaphore, #tpu.memory_space<semaphore_mem>>
      tpu.enqueue_dma source(%116 : memref<128xf32, #tpu.memory_space<any>>) target(%118 : memref<128xf32, #tpu.memory_space<vmem>>) target_semaphore(%120 : memref<!tpu.dma_semaphore, #tpu.memory_space<semaphore_mem>>)
    } else {
    }
    %c0_i32_9 = arith.constant 0 : i32
    %c0_i32_10 = arith.constant 0 : i32
    %18 = tpu.memref_slice %arg3[%c0_i32_9, %c0_i32_10] : memref<64x128xf32, #tpu.memory_space<any>> -> memref<8x128xf32, #tpu.memory_space<any>>
    %c0_i32_11 = arith.constant 0 : i32
    %c0_i32_12 = arith.constant 0 : i32
    %19 = tpu.memref_slice %arg5[%9, %c0_i32_11, %c0_i32_12] : memref<2x8x128xf32, #tpu.memory_space<vmem>> -> memref<1x8x128xf32, #tpu.memory_space<vmem>>
    %20 = tpu.memref_squeeze %19 : memref<1x8x128xf32, #tpu.memory_space<vmem>> -> memref<8x128xf32, #tpu.memory_space<vmem>>
    %21 = tpu.memref_slice %arg6[%9] : memref<2x!tpu.dma_semaphore, #tpu.memory_space<semaphore_mem>> -> memref<1x!tpu.dma_semaphore, #tpu.memory_space<semaphore_mem>>
    %22 = tpu.memref_squeeze %21 : memref<1x!tpu.dma_semaphore, #tpu.memory_space<semaphore_mem>> -> memref<!tpu.dma_semaphore, #tpu.memory_space<semaphore_mem>>
    tpu.wait_dma2 semaphore(%22 : memref<!tpu.dma_semaphore, #tpu.memory_space<semaphore_mem>>) src(%18 : memref<8x128xf32, #tpu.memory_space<any>>) dst(%20 : memref<8x128xf32, #tpu.memory_space<vmem>>)
    %23 = arith.index_cast %9 : i32 to index
    %c0 = arith.constant 0 : index
    %c0_13 = arith.constant 0 : index
    %24 = vector.load %arg5[%23, %c0, %c0_13] : memref<2x8x128xf32, #tpu.memory_space<vmem>>, vector<1x8x128xf32>
    %25 = vector.shape_cast %24 : vector<1x8x128xf32> to vector<8x128xf32>
    %cst = arith.constant 11.3137083 : f32
    %26 = vector.broadcast %cst : f32 to vector<8x128xf32>
    %27 = arith.mulf %25, %26 : vector<8x128xf32>
    %c0_14 = arith.constant 0 : index
    %c0_15 = arith.constant 0 : index
    %28 = vector.load %arg4[%c0_14, %c0_15] : memref<8x128xf32, #tpu.memory_space<vmem>>, vector<8x128xf32>
    tpu.vector_store %arg4[%c0_14, %c0_15], %27 {strides = array<i32>} : memref<8x128xf32, #tpu.memory_space<vmem>>, vector<8x128xf32>,
    return
  }
  func.func @transform_1(%arg0: i32, %arg1: i32, %arg2: memref<32xi32, #tpu.memory_space<smem>>) -> (i32, i32) {
    %c2_i32 = arith.constant 2 : i32
    %0 = arith.muli %arg0, %c2_i32 : i32
    %1 = arith.addi %0, %arg1 : i32
    %c0_i32 = arith.constant 0 : i32
    %c0_i32_0 = arith.constant 0 : i32
    return %1, %c0_i32 : i32, i32
  }
}

</mosaic_0001>

<llo_original>
// kernel: tpu_custom_call.1
$region0: #{tpu_custom_call.1}
  #allocation0 [shape = 'u32[]', space=smem, size = 0x4, offset = 0x4, fixed_abs, tag = 'smem constant byte address 0x4 - core index']
  #allocation1 [shape = 'u32[144,128]{1,0:T(1,128)}', space=vmem, size = 0x12000, scoped, tag = 'internal scratch']
  #allocation2 [shape = 'f32[2,8,128]{2,1,0:T(8,128)}', space=vmem, size = 0x2000, scoped, tag = 'scratch operand']
  #allocation3 [shape = 's32[2]{0}', space=sflag, size = 0x8, scoped, tag = 'scratch operand']
  #allocation4 [shape = 's32[1]{0}', space=sflag, size = 0x4, scoped, tag = 'scoped memory for tpu_custom_call.1']
  #allocation5 [shape = 'u8[512]{0}', space=smem, size = 0x200, scoped, tag = 'prefetched SMEM operand 0']
  #allocation8 [shape = 's32[]', space=sflag, size = 0x4, offset = 0, fixed_abs, tag = 'sflag constant byte address 0x0 - dummy sync flag']
  #allocation9 [shape = 's32[]', space=sflag, size = 0x4, offset = 0, fixed_abs, tag = 'sflag constant byte address 0x0 - dummy sync flag']
  #allocation10 [shape = 'u32[]', space=smem, size = 0x4, offset = 0x44, fixed_abs, tag = 'smem constant byte address 0x44 - assertion arg 0']
  #allocation11 [shape = 'u32[]', space=smem, size = 0x4, offset = 0x48, fixed_abs, tag = 'smem constant byte address 0x48 - assertion arg 1']
  #allocation12 [shape = 's32[]', space=sflag, size = 0x4, offset = 0, fixed_abs, tag = 'sflag constant byte address 0x0 - dummy sync flag']
  #allocation13 [shape = 's32[]', space=sflag, size = 0x4, offset = 0, fixed_abs, tag = 'sflag constant byte address 0x0 - dummy sync flag']
  #allocation14 [shape = 's32[]', space=sflag, size = 0x4, offset = 0, fixed_abs, tag = 'sflag constant byte address 0x0 - dummy sync flag']
  #allocation15 [shape = 's32[]', space=sflag, size = 0x4, offset = 0, fixed_abs, tag = 'sflag constant byte address 0x0 - dummy sync flag']
  #allocation16 [shape = 's32[]', space=sflag, size = 0x4, offset = 0, fixed_abs, tag = 'sflag constant byte address 0x0 - dummy sync flag']
  #allocation17 [shape = 's32[]', space=sflag, size = 0x4, offset = 0, fixed_abs, tag = 'sflag constant byte address 0x0 - dummy sync flag']
  #allocation18 [shape = 's32[]', space=sflag, size = 0x4, offset = 0, fixed_abs, tag = 'sflag constant byte address 0x0 - dummy sync flag']
  #allocation19 [shape = 's32[]', space=sflag, size = 0x4, offset = 0, fixed_abs, tag = 'sflag constant byte address 0x0 - dummy sync flag']
  #allocation20 [shape = 's32[]', space=sflag, size = 0x4, offset = 0, fixed_abs, tag = 'sflag constant byte address 0x0 - dummy sync flag']
  #allocation21 [shape = 's32[]', space=sflag, size = 0x4, offset = 0, fixed_abs, tag = 'sflag constant byte address 0x0 - dummy sync flag']
  #allocation22 [shape = 's32[]', space=sflag, size = 0x4, offset = 0, fixed_abs, tag = 'sflag constant byte address 0x0 - dummy sync flag']
  #allocation23 [shape = 's32[]', space=sflag, size = 0x4, offset = 0, fixed_abs, tag = 'sflag constant byte address 0x0 - dummy sync flag']
  #allocation24 [shape = 's32[]', space=sflag, size = 0x4, offset = 0, fixed_abs, tag = 'sflag constant byte address 0x0 - dummy sync flag']
  #allocation25 [shape = 's32[]', space=sflag, size = 0x4, offset = 0, fixed_abs, tag = 'sflag constant byte address 0x0 - dummy sync flag']
  #allocation26 [shape = 's32[]', space=sflag, size = 0x4, offset = 0, fixed_abs, tag = 'sflag constant byte address 0x0 - dummy sync flag']
  #allocation27 [shape = 's32[]', space=sflag, size = 0x4, offset = 0, fixed_abs, tag = 'sflag constant byte address 0x0 - dummy sync flag']
  #allocation28 [shape = 's32[]', space=sflag, size = 0x4, offset = 0, fixed_abs, tag = 'sflag constant byte address 0x0 - dummy sync flag']
  #allocation29 [shape = 's32[]', space=sflag, size = 0x4, offset = 0, fixed_abs, tag = 'sflag constant byte address 0x0 - dummy sync flag']
  #allocation30 [shape = 's32[]', space=sflag, size = 0x4, offset = 0, fixed_abs, tag = 'sflag constant byte address 0x0 - dummy sync flag']
  #allocation31 [shape = 's32[]', space=sflag, size = 0x4, offset = 0, fixed_abs, tag = 'sflag constant byte address 0x0 - dummy sync flag']
  #allocation32 [shape = 's32[]', space=sflag, size = 0x4, offset = 0, fixed_abs, tag = 'sflag constant byte address 0x0 - dummy sync flag']
  #allocation33 [shape = 's32[]', space=sflag, size = 0x4, offset = 0, fixed_abs, tag = 'sflag constant byte address 0x0 - dummy sync flag']
  #allocation34 [shape = 's32[]', space=sflag, size = 0x4, offset = 0, fixed_abs, tag = 'sflag constant byte address 0x0 - dummy sync flag']
  #allocation35 [shape = 's32[]', space=sflag, size = 0x4, offset = 0, fixed_abs, tag = 'sflag constant byte address 0x0 - dummy sync flag']
  #allocation36 [shape = 's32[]', space=sflag, size = 0x4, offset = 0, fixed_abs, tag = 'sflag constant byte address 0x0 - dummy sync flag']
  #allocation37 [shape = 's32[]', space=sflag, size = 0x4, offset = 0, fixed_abs, tag = 'sflag constant byte address 0x0 - dummy sync flag']
  #allocation38 [shape = 's32[]', space=sflag, size = 0x4, offset = 0, fixed_abs, tag = 'sflag constant byte address 0x0 - dummy sync flag']
  #allocation39 [shape = 's32[]', space=sflag, size = 0x4, offset = 0, fixed_abs, tag = 'sflag constant byte address 0x0 - dummy sync flag']
  #allocation40 [shape = 's32[]', space=sflag, size = 0x4, offset = 0, fixed_abs, tag = 'sflag constant byte address 0x0 - dummy sync flag']
  #allocation41 [shape = 's32[]', space=sflag, size = 0x4, offset = 0, fixed_abs, tag = 'sflag constant byte address 0x0 - dummy sync flag']
  %s0 = inlined_call_operand.hbm [shape: s32[32], index: 0, kind: input, shape index: {}]
  %s1 = inlined_call_operand.hbm [shape: f32[64,128], index: 1, kind: input, shape index: {}]
  %s2 = inlined_call_operand.hbm [shape: f32[32,128], index: 2, kind: output, shape index: {}]
  %s3 = sld [smem:[#allocation0]]
  $region97: #{tpu_custom_call.1} parent=0
    _
  %s5 = ssub.s32 1, %s3
  %s6 = scalar_select 0, %s5, %s3
  %8 = dma.hbm_to_smem %s0, 16, [#allocation5], [#allocation4]
  %9 = dma.done [#allocation4], 16
  %10 = sfence
  $region1: #{tpu_custom_call.1} parent=0
    #allocation6 [shape = 'u8[8192]{0}', space=vmem, size = 0x2000, scoped, tag = 'output window, operand 0']
    #allocation7 [shape = 's32[2]{0}', space=sflag, size = 0x8, scoped, tag = 'scoped memory for tpu_custom_call.1']
    %11 = vsyncpa [#allocation7], 0
    %s12 = scalar_lea.sflag [#allocation7], 1
    %13 = vsyncpa %s12, 0
    loop: start=0, step=1, limit=5
    $region2: #{tpu_custom_call.1} parent=1 // loop_pre_header
      _
    $region3: #{tpu_custom_call.1} parent=1 // loop_header
      %s15 = sphi 0, %s19
      %p16 = scmp.ge.s32.totalorder %s15, 5
      %s21 = sphi 0, %s31
      %s22 = sphi 0, %s27
      %s23 = sphi 0, %s21
      %s24 = sphi 0, %s22
      %s38 = sphi 0, %s40
      %s41 = sphi 0, %s38
      %s51 = sphi 0, %s41
    $region4: #{tpu_custom_call.1} parent=1 // loop_header_branch
      %18 = sbr.rel (%p16) target = $region8
    $region5: #{tpu_custom_call.1} parent=1 // loop_body
      %s20 = ssub.s32 %s15, 1
      %s25 = sadd.s32 1, %s22
      %p26 = scmp.ge.s32.totalorder %s25, 2
      %s27 = scalar_select %p26, 0, %s25
      %s28 = sadd.s32 1, %s21
      %s29 = scalar_select %p26, %s28, %s21
      %p30 = scmp.ge.s32.totalorder %s29, 2
      %s31 = scalar_select %p30, 0, %s29
      %s32 = smul.u32 %s21, 2
      %s33 = sadd.s32 %s32, %s22
      %s34 = smul.u32 %s31, 2
      %s35 = sadd.s32 %s34, %s27
      %s36 = ssub.s32 %s33, %s35
      %p37 = scmp.eq.s32.totalorder %s36, 0
      %s39 = sadd.s32 %s38, 1
      %s40 = scalar_select %p37, %s38, %s39
      %p42 = pneg %p37
      %p43 = scmp.eq.s32.totalorder %s15, 3
      %p44 = por %p42, %p43
      %p45 = scmp.ne.s32.totalorder %s38, %s41
      %p46 = scmp.eq.s32.totalorder %s15, 0
      %p47 = por %p45, %p46
      %p48 = scmp.ne.s32.totalorder %s38, %s41
      %p49 = scmp.eq.s32.totalorder %s20, 3
      %p50 = por %p48, %p49
      %p52 = scmp.ne.s32.totalorder %s41, %s51
      %p53 = scmp.eq.s32.totalorder %s20, 0
      %p54 = por %p52, %p53
      %p55 = scmp.lt.s32.totalorder %s15, 4
      // Predicated region
      $region9: #{tpu_custom_call.1} parent=5 // pred_check
        %p56 = pneg %p55
      $region10: #{tpu_custom_call.1} parent=5 // pred_check_branch
        %58 = sbr.rel (%p56) target = $region12
      $region11: #{tpu_custom_call.1} parent=5 // pred_region
        %p59 = pneg %p47
        %p60 = pneg %p44
        %s61 = sand.u32 %s38, 1
        %s62 = scalar_lea.sflag [#allocation7], %s61
        %s63 = sand.u32 %s38, 1
        %s64 = smul.addr %s63, 8
        %s65 = scalar_lea.vmem [#allocation6], %s64
        %s66 = smul.u32 %s21, 2
        %s67 = sadd.s32 %s66, %s22
        %p68 = scmp.lt.s32.totalorder %s22, 0
        %s69 = ssub.s32 0, %s22
        %s70 = scalar_select %p68, %s69, %s22
        %s71 = sand.u32 %s70, 1
        %s72 = ssub.s32 0, %s71
        %s73 = scalar_select %p68, %s72, %s71
        %p74 = scmp.ne.s32.totalorder %s73, 0
        %p75 = scmp.lt.s32.totalorder %s73, 0
        %p76 = pnand %p75, %p74
        %p77 = pneg %p76
        %s78 = sadd.s32 %s73, 2
        %s79 = scalar_select %p77, %s78, %s73
        %s80 = ssub.s32 1, %s79
        %p81 = scmp.eq.s32.totalorder %s22, 0
        // Predicated region
        $region13: #{tpu_custom_call.1} parent=11 // pred_check
          %p82 = pneg %p81
        $region14: #{tpu_custom_call.1} parent=11 // pred_check_branch
          %84 = sbr.rel (%p82) target = $region16
        $region15: #{tpu_custom_call.1} parent=11 // pred_region
          %s85 = smul.u32 %s21, 16
          %s86 = sld [smem:[#allocation5 + %s85]]
          %p87 = scmp.gt.s32.totalorder %s86, 0
          %s88 = scalar_select %p87, %s86, 0
          %p89 = scmp.lt.s32.totalorder %s88, 63
          %s90 = scalar_select %p89, %s88, 63
          %s91 = smul.addr %s90, 16
          %s92 = scalar_lea.hbm %s1, %s91
          %s93 = smul.u32 %s79, 8
          %s94 = scalar_lea.vmem [#allocation2], %s93
          %s95 = scalar_lea.sflag [#allocation3], %s79
          // Predicated region
          $region17: #{tpu_custom_call.1} parent=15 // pred_check
            _
          $region18: #{tpu_custom_call.1} parent=15 // pred_check_branch
            %97 = sbr.rel target = $region20
          $region19: #{tpu_custom_call.1} parent=15 // pred_region
            %98 = sst [smem:[#allocation10]] [#allocation9]
            %99 = sst [smem:[#allocation11]] [#allocation8]
          $region20: #{tpu_custom_call.1} parent=15 // pred_fallthru
            _
          %101 = shalt.err (0)
          %s103 = sshll.u32 %s94, 4
          %s104 = int_to_ptr.vmem [resolvable:$true] %s103
          %106 = dma.hbm_to_vmem [thread:$0]  %s92, 16, %s104, %s95
          %s107 = sadd.s32 %s85, 1
          %s108 = sld [smem:[#allocation5 + %s107]]
          %p109 = scmp.gt.s32.totalorder %s108, 0
          %s110 = scalar_select %p109, %s108, 0
          %p111 = scmp.lt.s32.totalorder %s110, 63
          %s112 = scalar_select %p111, %s110, 63
          %s113 = smul.addr %s112, 16
          %s114 = scalar_lea.hbm %s1, %s113
          %s115 = sadd.s32 1, %s93
          %s116 = scalar_lea.vmem [#allocation2], %s115
          // Predicated region
          $region21: #{tpu_custom_call.1} parent=15 // pred_check
            _
          $region22: #{tpu_custom_call.1} parent=15 // pred_check_branch
            %118 = sbr.rel target = $region24
          $region23: #{tpu_custom_call.1} parent=15 // pred_region
            %119 = sst [smem:[#allocation10]] [#allocation13]
            %120 = sst [smem:[#allocation11]] [#allocation12]
          $region24: #{tpu_custom_call.1} parent=15 // pred_fallthru
            _
          %122 = shalt.err (0)
          %s124 = sshll.u32 %s116, 4
          %s125 = int_to_ptr.vmem [resolvable:$true] %s124
          %127 = dma.hbm_to_vmem [thread:$0]  %s114, 16, %s125, %s95
          %s128 = sadd.s32 %s85, 2
          %s129 = sld [smem:[#allocation5 + %s128]]
          %p130 = scmp.gt.s32.totalorder %s129, 0
          %s131 = scalar_select %p130, %s129, 0
          %p132 = scmp.lt.s32.totalorder %s131, 63
          %s133 = scalar_select %p132, %s131, 63
          %s134 = smul.addr %s133, 16
          %s135 = scalar_lea.hbm %s1, %s134
          %s136 = sadd.s32 2, %s93
          %s137 = scalar_lea.vmem [#allocation2], %s136
          // Predicated region
          $region25: #{tpu_custom_call.1} parent=15 // pred_check
            _
          $region26: #{tpu_custom_call.1} parent=15 // pred_check_branch
            %139 = sbr.rel target = $region28
          $region27: #{tpu_custom_call.1} parent=15 // pred_region
            %140 = sst [smem:[#allocation10]] [#allocation15]
            %141 = sst [smem:[#allocation11]] [#allocation14]
          $region28: #{tpu_custom_call.1} parent=15 // pred_fallthru
            _
          %143 = shalt.err (0)
          %s145 = sshll.u32 %s137, 4
          %s146 = int_to_ptr.vmem [resolvable:$true] %s145
          %148 = dma.hbm_to_vmem [thread:$0]  %s135, 16, %s146, %s95
          %s149 = sadd.s32 %s85, 3
          %s150 = sld [smem:[#allocation5 + %s149]]
          %p151 = scmp.gt.s32.totalorder %s150, 0
          %s152 = scalar_select %p151, %s150, 0
          %p153 = scmp.lt.s32.totalorder %s152, 63
          %s154 = scalar_select %p153, %s152, 63
          %s155 = smul.addr %s154, 16
          %s156 = scalar_lea.hbm %s1, %s155
          %s157 = sadd.s32 3, %s93
          %s158 = scalar_lea.vmem [#allocation2], %s157
          // Predicated region
          $region29: #{tpu_custom_call.1} parent=15 // pred_check
            _
          $region30: #{tpu_custom_call.1} parent=15 // pred_check_branch
            %160 = sbr.rel target = $region32
          $region31: #{tpu_custom_call.1} parent=15 // pred_region
            %161 = sst [smem:[#allocation10]] [#allocation17]
            %162 = sst [smem:[#allocation11]] [#allocation16]
          $region32: #{tpu_custom_call.1} parent=15 // pred_fallthru
            _
          %164 = shalt.err (0)
          %s166 = sshll.u32 %s158, 4
          %s167 = int_to_ptr.vmem [resolvable:$true] %s166
          %169 = dma.hbm_to_vmem [thread:$0]  %s156, 16, %s167, %s95
          %s170 = sadd.s32 %s85, 4
          %s171 = sld [smem:[#allocation5 + %s170]]
          %p172 = scmp.gt.s32.totalorder %s171, 0
          %s173 = scalar_select %p172, %s171, 0
          %p174 = scmp.lt.s32.totalorder %s173, 63
          %s175 = scalar_select %p174, %s173, 63
          %s176 = smul.addr %s175, 16
          %s177 = scalar_lea.hbm %s1, %s176
          %s178 = sadd.s32 4, %s93
          %s179 = scalar_lea.vmem [#allocation2], %s178
          // Predicated region
          $region33: #{tpu_custom_call.1} parent=15 // pred_check
            _
          $region34: #{tpu_custom_call.1} parent=15 // pred_check_branch
            %181 = sbr.rel target = $region36
          $region35: #{tpu_custom_call.1} parent=15 // pred_region
            %182 = sst [smem:[#allocation10]] [#allocation19]
            %183 = sst [smem:[#allocation11]] [#allocation18]
          $region36: #{tpu_custom_call.1} parent=15 // pred_fallthru
            _
          %185 = shalt.err (0)
          %s187 = sshll.u32 %s179, 4
          %s188 = int_to_ptr.vmem [resolvable:$true] %s187
          %190 = dma.hbm_to_vmem [thread:$0]  %s177, 16, %s188, %s95
          %s191 = sadd.s32 %s85, 5
          %s192 = sld [smem:[#allocation5 + %s191]]
          %p193 = scmp.gt.s32.totalorder %s192, 0
          %s194 = scalar_select %p193, %s192, 0
          %p195 = scmp.lt.s32.totalorder %s194, 63
          %s196 = scalar_select %p195, %s194, 63
          %s197 = smul.addr %s196, 16
          %s198 = scalar_lea.hbm %s1, %s197
          %s199 = sadd.s32 5, %s93
          %s200 = scalar_lea.vmem [#allocation2], %s199
          // Predicated region
          $region37: #{tpu_custom_call.1} parent=15 // pred_check
            _
          $region38: #{tpu_custom_call.1} parent=15 // pred_check_branch
            %202 = sbr.rel target = $region40
          $region39: #{tpu_custom_call.1} parent=15 // pred_region
            %203 = sst [smem:[#allocation10]] [#allocation21]
            %204 = sst [smem:[#allocation11]] [#allocation20]
          $region40: #{tpu_custom_call.1} parent=15 // pred_fallthru
            _
          %206 = shalt.err (0)
          %s208 = sshll.u32 %s200, 4
          %s209 = int_to_ptr.vmem [resolvable:$true] %s208
          %211 = dma.hbm_to_vmem [thread:$0]  %s198, 16, %s209, %s95
          %s212 = sadd.s32 %s85, 6
          %s213 = sld [smem:[#allocation5 + %s212]]
          %p214 = scmp.gt.s32.totalorder %s213, 0
          %s215 = scalar_select %p214, %s213, 0
          %p216 = scmp.lt.s32.totalorder %s215, 63
          %s217 = scalar_select %p216, %s215, 63
          %s218 = smul.addr %s217, 16
          %s219 = scalar_lea.hbm %s1, %s218
          %s220 = sadd.s32 6, %s93
          %s221 = scalar_lea.vmem [#allocation2], %s220
          // Predicated region
          $region41: #{tpu_custom_call.1} parent=15 // pred_check
            _
          $region42: #{tpu_custom_call.1} parent=15 // pred_check_branch
            %223 = sbr.rel target = $region44
          $region43: #{tpu_custom_call.1} parent=15 // pred_region
            %224 = sst [smem:[#allocation10]] [#allocation23]
            %225 = sst [smem:[#allocation11]] [#allocation22]
          $region44: #{tpu_custom_call.1} parent=15 // pred_fallthru
            _
          %227 = shalt.err (0)
          %s229 = sshll.u32 %s221, 4
          %s230 = int_to_ptr.vmem [resolvable:$true] %s229
          %232 = dma.hbm_to_vmem [thread:$0]  %s219, 16, %s230, %s95
          %s233 = sadd.s32 %s85, 7
          %s234 = sld [smem:[#allocation5 + %s233]]
          %p235 = scmp.gt.s32.totalorder %s234, 0
          %s236 = scalar_select %p235, %s234, 0
          %p237 = scmp.lt.s32.totalorder %s236, 63
          %s238 = scalar_select %p237, %s236, 63
          %s239 = smul.addr %s238, 16
          %s240 = scalar_lea.hbm %s1, %s239
          %s241 = sadd.s32 7, %s93
          %s242 = scalar_lea.vmem [#allocation2], %s241
          // Predicated region
          $region45: #{tpu_custom_call.1} parent=15 // pred_check
            _
          $region46: #{tpu_custom_call.1} parent=15 // pred_check_branch
            %244 = sbr.rel target = $region48
          $region47: #{tpu_custom_call.1} parent=15 // pred_region
            %245 = sst [smem:[#allocation10]] [#allocation25]
            %246 = sst [smem:[#allocation11]] [#allocation24]
          $region48: #{tpu_custom_call.1} parent=15 // pred_fallthru
            _
          %248 = shalt.err (0)
          %s250 = sshll.u32 %s242, 4
          %s251 = int_to_ptr.vmem [resolvable:$true] %s250
          %253 = dma.hbm_to_vmem [thread:$0]  %s240, 16, %s251, %s95
        $region16: #{tpu_custom_call.1} parent=11 // pred_fallthru
          _
        %s254 = sadd.s32 %s22, 1
        %p255 = scmp.lt.s32.totalorder %s254, 2
        // Predicated region
        $region49: #{tpu_custom_call.1} parent=11 // pred_check
          %p256 = pneg %p255
        $region50: #{tpu_custom_call.1} parent=11 // pred_check_branch
          %258 = sbr.rel (%p256) target = $region52
        $region51: #{tpu_custom_call.1} parent=11 // pred_region
          %s259 = smul.u32 %s21, 2
          %s260 = sadd.s32 %s259, %s22
          %s261 = sadd.s32 %s260, 1
          %s262 = smul.u32 %s261, 8
          %s263 = sld [smem:[#allocation5 + %s262]]
          %p264 = scmp.gt.s32.totalorder %s263, 0
          %s265 = scalar_select %p264, %s263, 0
          %p266 = scmp.lt.s32.totalorder %s265, 63
          %s267 = scalar_select %p266, %s265, 63
          %s268 = smul.addr %s267, 16
          %s269 = scalar_lea.hbm %s1, %s268
          %s270 = smul.u32 %s80, 8
          %s271 = scalar_lea.vmem [#allocation2], %s270
          %s272 = scalar_lea.sflag [#allocation3], %s80
          // Predicated region
          $region53: #{tpu_custom_call.1} parent=51 // pred_check
            _
          $region54: #{tpu_custom_call.1} parent=51 // pred_check_branch
            %274 = sbr.rel target = $region56
          $region55: #{tpu_custom_call.1} parent=51 // pred_region
            %275 = sst [smem:[#allocation10]] [#allocation27]
            %276 = sst [smem:[#allocation11]] [#allocation26]
          $region56: #{tpu_custom_call.1} parent=51 // pred_fallthru
            _
          %278 = shalt.err (0)
          %s280 = sshll.u32 %s271, 4
          %s281 = int_to_ptr.vmem [resolvable:$true] %s280
          %283 = dma.hbm_to_vmem [thread:$0]  %s269, 16, %s281, %s272
          %s284 = sadd.s32 %s262, 1
          %s285 = sld [smem:[#allocation5 + %s284]]
          %p286 = scmp.gt.s32.totalorder %s285, 0
          %s287 = scalar_select %p286, %s285, 0
          %p288 = scmp.lt.s32.totalorder %s287, 63
          %s289 = scalar_select %p288, %s287, 63
          %s290 = smul.addr %s289, 16
          %s291 = scalar_lea.hbm %s1, %s290
          %s292 = sadd.s32 1, %s270
          %s293 = scalar_lea.vmem [#allocation2], %s292
          // Predicated region
          $region57: #{tpu_custom_call.1} parent=51 // pred_check
            _
          $region58: #{tpu_custom_call.1} parent=51 // pred_check_branch
            %295 = sbr.rel target = $region60
          $region59: #{tpu_custom_call.1} parent=51 // pred_region
            %296 = sst [smem:[#allocation10]] [#allocation29]
            %297 = sst [smem:[#allocation11]] [#allocation28]
          $region60: #{tpu_custom_call.1} parent=51 // pred_fallthru
            _
          %299 = shalt.err (0)
          %s301 = sshll.u32 %s293, 4
          %s302 = int_to_ptr.vmem [resolvable:$true] %s301
          %304 = dma.hbm_to_vmem [thread:$0]  %s291, 16, %s302, %s272
          %s305 = sadd.s32 %s262, 2
          %s306 = sld [smem:[#allocation5 + %s305]]
          %p307 = scmp.gt.s32.totalorder %s306, 0
          %s308 = scalar_select %p307, %s306, 0
          %p309 = scmp.lt.s32.totalorder %s308, 63
          %s310 = scalar_select %p309, %s308, 63
          %s311 = smul.addr %s310, 16
          %s312 = scalar_lea.hbm %s1, %s311
          %s313 = sadd.s32 2, %s270
          %s314 = scalar_lea.vmem [#allocation2], %s313
          // Predicated region
          $region61: #{tpu_custom_call.1} parent=51 // pred_check
            _
          $region62: #{tpu_custom_call.1} parent=51 // pred_check_branch
            %316 = sbr.rel target = $region64
          $region63: #{tpu_custom_call.1} parent=51 // pred_region
            %317 = sst [smem:[#allocation10]] [#allocation31]
            %318 = sst [smem:[#allocation11]] [#allocation30]
          $region64: #{tpu_custom_call.1} parent=51 // pred_fallthru
            _
          %320 = shalt.err (0)
          %s322 = sshll.u32 %s314, 4
          %s323 = int_to_ptr.vmem [resolvable:$true] %s322
          %325 = dma.hbm_to_vmem [thread:$0]  %s312, 16, %s323, %s272
          %s326 = sadd.s32 %s262, 3
          %s327 = sld [smem:[#allocation5 + %s326]]
          %p328 = scmp.gt.s32.totalorder %s327, 0
          %s329 = scalar_select %p328, %s327, 0
          %p330 = scmp.lt.s32.totalorder %s329, 63
          %s331 = scalar_select %p330, %s329, 63
          %s332 = smul.addr %s331, 16
          %s333 = scalar_lea.hbm %s1, %s332
          %s334 = sadd.s32 3, %s270
          %s335 = scalar_lea.vmem [#allocation2], %s334
          // Predicated region
          $region65: #{tpu_custom_call.1} parent=51 // pred_check
            _
          $region66: #{tpu_custom_call.1} parent=51 // pred_check_branch
            %337 = sbr.rel target = $region68
          $region67: #{tpu_custom_call.1} parent=51 // pred_region
            %338 = sst [smem:[#allocation10]] [#allocation33]
            %339 = sst [smem:[#allocation11]] [#allocation32]
          $region68: #{tpu_custom_call.1} parent=51 // pred_fallthru
            _
          %341 = shalt.err (0)
          %s343 = sshll.u32 %s335, 4
          %s344 = int_to_ptr.vmem [resolvable:$true] %s343
          %346 = dma.hbm_to_vmem [thread:$0]  %s333, 16, %s344, %s272
          %s347 = sadd.s32 %s262, 4
          %s348 = sld [smem:[#allocation5 + %s347]]
          %p349 = scmp.gt.s32.totalorder %s348, 0
          %s350 = scalar_select %p349, %s348, 0
          %p351 = scmp.lt.s32.totalorder %s350, 63
          %s352 = scalar_select %p351, %s350, 63
          %s353 = smul.addr %s352, 16
          %s354 = scalar_lea.hbm %s1, %s353
          %s355 = sadd.s32 4, %s270
          %s356 = scalar_lea.vmem [#allocation2], %s355
          // Predicated region
          $region69: #{tpu_custom_call.1} parent=51 // pred_check
            _
          $region70: #{tpu_custom_call.1} parent=51 // pred_check_branch
            %358 = sbr.rel target = $region72
          $region71: #{tpu_custom_call.1} parent=51 // pred_region
            %359 = sst [smem:[#allocation10]] [#allocation35]
            %360 = sst [smem:[#allocation11]] [#allocation34]
          $region72: #{tpu_custom_call.1} parent=51 // pred_fallthru
            _
          %362 = shalt.err (0)
          %s364 = sshll.u32 %s356, 4
          %s365 = int_to_ptr.vmem [resolvable:$true] %s364
          %367 = dma.hbm_to_vmem [thread:$0]  %s354, 16, %s365, %s272
          %s368 = sadd.s32 %s262, 5
          %s369 = sld [smem:[#allocation5 + %s368]]
          %p370 = scmp.gt.s32.totalorder %s369, 0
          %s371 = scalar_select %p370, %s369, 0
          %p372 = scmp.lt.s32.totalorder %s371, 63
          %s373 = scalar_select %p372, %s371, 63
          %s374 = smul.addr %s373, 16
          %s375 = scalar_lea.hbm %s1, %s374
          %s376 = sadd.s32 5, %s270
          %s377 = scalar_lea.vmem [#allocation2], %s376
          // Predicated region
          $region73: #{tpu_custom_call.1} parent=51 // pred_check
            _
          $region74: #{tpu_custom_call.1} parent=51 // pred_check_branch
            %379 = sbr.rel target = $region76
          $region75: #{tpu_custom_call.1} parent=51 // pred_region
            %380 = sst [smem:[#allocation10]] [#allocation37]
            %381 = sst [smem:[#allocation11]] [#allocation36]
          $region76: #{tpu_custom_call.1} parent=51 // pred_fallthru
            _
          %383 = shalt.err (0)
          %s385 = sshll.u32 %s377, 4
          %s386 = int_to_ptr.vmem [resolvable:$true] %s385
          %388 = dma.hbm_to_vmem [thread:$0]  %s375, 16, %s386, %s272
          %s389 = sadd.s32 %s262, 6
          %s390 = sld [smem:[#allocation5 + %s389]]
          %p391 = scmp.gt.s32.totalorder %s390, 0
          %s392 = scalar_select %p391, %s390, 0
          %p393 = scmp.lt.s32.totalorder %s392, 63
          %s394 = scalar_select %p393, %s392, 63
          %s395 = smul.addr %s394, 16
          %s396 = scalar_lea.hbm %s1, %s395
          %s397 = sadd.s32 6, %s270
          %s398 = scalar_lea.vmem [#allocation2], %s397
          // Predicated region
          $region77: #{tpu_custom_call.1} parent=51 // pred_check
            _
          $region78: #{tpu_custom_call.1} parent=51 // pred_check_branch
            %400 = sbr.rel target = $region80
          $region79: #{tpu_custom_call.1} parent=51 // pred_region
            %401 = sst [smem:[#allocation10]] [#allocation39]
            %402 = sst [smem:[#allocation11]] [#allocation38]
          $region80: #{tpu_custom_call.1} parent=51 // pred_fallthru
            _
          %404 = shalt.err (0)
          %s406 = sshll.u32 %s398, 4
          %s407 = int_to_ptr.vmem [resolvable:$true] %s406
          %409 = dma.hbm_to_vmem [thread:$0]  %s396, 16, %s407, %s272
          %s410 = sadd.s32 %s262, 7
          %s411 = sld [smem:[#allocation5 + %s410]]
          %p412 = scmp.gt.s32.totalorder %s411, 0
          %s413 = scalar_select %p412, %s411, 0
          %p414 = scmp.lt.s32.totalorder %s413, 63
          %s415 = scalar_select %p414, %s413, 63
          %s416 = smul.addr %s415, 16
          %s417 = scalar_lea.hbm %s1, %s416
          %s418 = sadd.s32 7, %s270
          %s419 = scalar_lea.vmem [#allocation2], %s418
          // Predicated region
          $region81: #{tpu_custom_call.1} parent=51 // pred_check
            _
          $region82: #{tpu_custom_call.1} parent=51 // pred_check_branch
            %421 = sbr.rel target = $region84
          $region83: #{tpu_custom_call.1} parent=51 // pred_region
            %422 = sst [smem:[#allocation10]] [#allocation41]
            %423 = sst [smem:[#allocation11]] [#allocation40]
          $region84: #{tpu_custom_call.1} parent=51 // pred_fallthru
            _
          %425 = shalt.err (0)
          %s427 = sshll.u32 %s419, 4
          %s428 = int_to_ptr.vmem [resolvable:$true] %s427
          %430 = dma.hbm_to_vmem [thread:$0]  %s417, 16, %s428, %s272
        $region52: #{tpu_custom_call.1} parent=11 // pred_fallthru
          _
        %s431 = smul.u32 %s79, 8
        %s432 = scalar_lea.vmem [#allocation2], %s431
        %s433 = scalar_lea.sflag [#allocation3], %s79
        %s434 = smul.u32 8, 1
        %s435 = sshll.u32 %s434, 4
        %436 = dma.done %s433, %s435
        %v437 = vld [vmem:[%s432] sm:$0xff]
        %v438 = vmul.f32 %v437, 11.313708
        %439 = vst [vmem:[%s65] sm:$0xff] %v438
        %s440 = sand.u32 %s38, 1
        %s441 = scalar_lea.sflag [#allocation7], %s440
        %s442 = sand.u32 %s38, 1
        %s443 = smul.addr %s442, 8
        %s444 = scalar_lea.vmem [#allocation6], %s443
        // Predicated region
        $region85: #{tpu_custom_call.1} parent=11 // pred_check
          %p445 = pneg %p44
        $region86: #{tpu_custom_call.1} parent=11 // pred_check_branch
          %447 = sbr.rel (%p445) target = $region88
        $region87: #{tpu_custom_call.1} parent=11 // pred_region
          %s448 = smul.u32 %s21, 2
          %s449 = sadd.s32 %s448, %s22
          %s451 = ssub.s32 128, 128
          %452 = vsyncadd %s441, %s451
          %s453 = smul.addr %s449, 128
          %s454 = scalar_lea.hbm %s2, %s453
          %s456 = sshll.u32 %s444, 4
          %s457 = int_to_ptr.vmem [resolvable:$true] %s456
          %459 = dma.vmem_to_hbm [thread:$0]  %s457, 128, %s454, %s441
        $region88: #{tpu_custom_call.1} parent=11 // pred_fallthru
          _
      $region12: #{tpu_custom_call.1} parent=5 // pred_fallthru
        _
      %p460 = scmp.le.s32.totalorder 1, %s15
      // Predicated region
      $region89: #{tpu_custom_call.1} parent=5 // pred_check
        %p461 = pneg %p460
      $region90: #{tpu_custom_call.1} parent=5 // pred_check_branch
        %463 = sbr.rel (%p461) target = $region92
      $region91: #{tpu_custom_call.1} parent=5 // pred_region
        %s464 = ssub.s32 %s15, 1
        // Predicated region
        $region93: #{tpu_custom_call.1} parent=91 // pred_check
          %p465 = pneg %p50
        $region94: #{tpu_custom_call.1} parent=91 // pred_check_branch
          %467 = sbr.rel (%p465) target = $region96
        $region95: #{tpu_custom_call.1} parent=91 // pred_region
          %s468 = sand.u32 %s41, 1
          %s469 = scalar_lea.sflag [#allocation7], %s468
          %s470 = sand.u32 %s41, 1
          %s471 = smul.addr %s470, 8
          %s472 = scalar_lea.vmem [#allocation6], %s471
          %473 = dma.done %s469, 128
        $region96: #{tpu_custom_call.1} parent=91 // pred_fallthru
          _
      $region92: #{tpu_custom_call.1} parent=5 // pred_fallthru
        _
    $region6: #{tpu_custom_call.1} parent=1 // loop_footer
      %s19 = sadd.s32 1, %s15
    $region7: #{tpu_custom_call.1} parent=1 // loop_footer_branch
      %14 = sbr.rel target = $region3
    $region8: #{tpu_custom_call.1} parent=1 // loop_exit
      _
    %474 = vsyncpa [#allocation7], 1
    %s475 = scalar_lea.sflag [#allocation7], 1
    %476 = vsyncpa %s475, 1
  %477 = vsyncmov [#allocation3]
  %s478 = vpop.sfrf %477
  %p479 = scmp.eq.s32.totalorder %s478, 0
  %p480 = pneg %p479
  %482 = shalt.err (%p480)
  %s483 = scalar_lea.sflag [#allocation3], 1
  %484 = vsyncmov %s483
  %s485 = vpop.sfrf %484
  %p486 = scmp.eq.s32.totalorder %s485, 0
  %p487 = pneg %p486
  %489 = shalt.err (%p487)

</llo_original>
